<compile_context>
chip_gen: v5e
topology: v5e:2x2
jax: 0.10.0
libtpu: 0.0.40
codegen_flags: <defaults>
</compile_context>

<pallas_src>
import jax
import jax.numpy as jnp
from jax.experimental import pallas as pl
from jax.experimental.pallas import tpu as pltpu


_LANES = 128
_SUBLANES = 8
_SMALL_BAILOUT_ELEMS = 1 << 20       # below this, XLA fusion beats a standalone kernel
_TILE_BUDGET_BYTES = 6 << 20         # per-tile target; 4x (dbl-buffered in+out) fits all gens
_VMEM_CAP_BYTES = 48 << 20           # stay well under v7x's 64 MiB physical VMEM


def _round_down(n: int, m: int) -> int:
    return (n // m) * m


def _prelu_kernel(x_ref, s_ref, o_ref):
    # Pure VPU elementwise work on a lane-dense (TB, cols) tile; slope row
    # (already exponentiated in the wrapper) broadcasts over rows.
    x = x_ref[...]
    o_ref[...] = jnp.where(x >= 0, x, x * s_ref[...])


def _run_tiled(x2, slope_row, *, tile_budget_bytes=_TILE_BUDGET_BYTES):
    """Stream a 2-D array through the PReLU kernel, tiling the leading axis."""
    rows, cols = x2.shape
    bytes_per_row = cols * x2.dtype.itemsize

    # Rows per tile from the VMEM budget, floored to a multiple of 8 sublanes.
    tb_budget = max(_SUBLANES, _round_down(tile_budget_bytes // bytes_per_row, _SUBLANES))
    if rows <= tb_budget:
        tb = rows                       # single full-extent block (no 8-row requirement)
    else:
        tb = tb_budget                  # multiple of 8; partial edge block is masked

    grid = pl.cdiv(rows, tb)
    tile_bytes = tb * bytes_per_row
    slope_bytes = slope_row.size * slope_row.dtype.itemsize
    # 2 buffers x (in + out tile) + resident slope + slack; capped for v7x headroom.
    vmem_limit = int(min(max(4 * tile_bytes + 2 * slope_bytes + (8 << 20), 16 << 20),
                         _VMEM_CAP_BYTES))

    return pl.pallas_call(
        _prelu_kernel,
        out_shape=jax.ShapeDtypeStruct((rows, cols), x2.dtype),
        grid=(grid,),
        in_specs=[
            pl.BlockSpec((tb, cols), lambda i: (i, 0)),   # streamed batch tiles
            pl.BlockSpec((1, cols), lambda i: (0, 0)),    # slope row stays VMEM-resident
        ],
        out_specs=pl.BlockSpec((tb, cols), lambda i: (i, 0)),
        compiler_params=pltpu.CompilerParams(
            dimension_semantics=("parallel",),            # shards across TCs on v7x
            vmem_limit_bytes=vmem_limit,
        ),
    )(x2, slope_row)


def prelu_forward(x, alphas, *, force_pallas=False, tile_budget_bytes=_TILE_BUDGET_BYTES):
    """y = where(x >= 0, x, exp(alphas) * x).  x: (B, C); alphas: (C,) log-slopes."""
    B, C = x.shape
    slope = jnp.exp(alphas).astype(x.dtype)      # hoisted: single trivial (C,) op

    if (B * C) < _SMALL_BAILOUT_ELEMS and not force_pallas:
        # Tiny inputs: a standalone kernel launch is pure overhead; let XLA fuse.
        return jnp.where(x >= 0, x, slope[None, :] * x)

    # Guard: a single 8-row tile must fit the VMEM cap (pathologically wide C).
    if 4 * _SUBLANES * C * x.dtype.itemsize + (8 << 20) > _VMEM_CAP_BYTES:
        # TODO(synk): tile along the channel axis for pathologically wide C.
        return jnp.where(x >= 0, x, slope[None, :] * x)

    if C % _LANES == 0:
        # Naturally lane-dense: stream x as-is (no pad / slice HBM passes).
        return _run_tiled(x, slope.reshape(1, C), tile_budget_bytes=tile_budget_bytes)

    if (_LANES % C == 0) and ((B * C) % _LANES == 0):
        # Narrow channels: pack 128 // C logical rows per 128-lane row.
        # reshape is layout-only; channel at lane l is l % C, so tiling the
        # slope row to 128 lanes matches exactly.
        rows = (B * C) // _LANES
        x2 = x.reshape(rows, _LANES)
        slope_row = jnp.tile(slope, _LANES // C).reshape(1, _LANES)
        out = _run_tiled(x2, slope_row, tile_budget_bytes=tile_budget_bytes)
        return out.reshape(B, C)

    # General case: channel block equals the full C (lane-divisibility waived for
    # full-extent dims). Masked stores, but zero byte inflation.
    return _run_tiled(x, slope.reshape(1, C), tile_budget_bytes=tile_budget_bytes)


def prelu_reference(x, alphas):
    slope = jnp.exp(alphas)[None, :]
    return jnp.where(x >= 0, x, slope * x)


if __name__ == "__main__":
    hparams = {"channels": 16, "batch_size": 8}
    B, C = hparams["batch_size"], hparams["channels"]

    key = jax.random.PRNGKey(0)
    kx, ka = jax.random.split(key)

    # make_normal_batch: standard-normal samples of shape (batch, channels).
    x = jax.random.normal(kx, (B, C), dtype=jnp.float32)
    # Module initializes alphas to zeros (identity PReLU); use nonzero values so
    # the negative-slope branch is actually exercised.
    alphas = 0.5 * jax.random.normal(ka, (C,), dtype=jnp.float32)
    y_ref = prelu_reference(x, alphas)

    # 1) Shipped shape, forced through the Pallas kernel (packed 128-lane path).
    y = jax.block_until_ready(prelu_forward(x, alphas, force_pallas=True))
    assert y.shape == (B, C) and y.dtype == jnp.float32
    assert jnp.allclose(y, y_ref, atol=1e-6, rtol=1e-6), "packed-path mismatch"

    # 2) Default entry at the shipped (tiny) shape: small-shape bailout path.
    y_d = jax.block_until_ready(prelu_forward(x, alphas))
    assert jnp.allclose(y_d, y_ref, atol=1e-6, rtol=1e-6), "bailout-path mismatch"

    # 3) Lane-dense streaming path (C % 128 == 0), with a tiny tile budget so the
    #    cdiv grid and masked partial edge block are exercised at a small shape.
    x2 = jax.random.normal(jax.random.PRNGKey(1), (300, 256), dtype=jnp.float32)
    a2 = 0.3 * jax.random.normal(jax.random.PRNGKey(2), (256,), dtype=jnp.float32)
    y2 = jax.block_until_ready(
        prelu_forward(x2, a2, force_pallas=True, tile_budget_bytes=32 << 10))
    assert jnp.allclose(y2, prelu_reference(x2, a2), atol=1e-6, rtol=1e-6), "lane-dense mismatch"

    # 4) General path (C neither divides nor is a multiple of 128): full-C blocks.
    x3 = jax.random.normal(jax.random.PRNGKey(3), (64, 96), dtype=jnp.float32)
    a3 = 0.3 * jax.random.normal(jax.random.PRNGKey(4), (96,), dtype=jnp.float32)
    y3 = jax.block_until_ready(
        prelu_forward(x3, a3, force_pallas=True, tile_budget_bytes=8 << 10))
    assert jnp.allclose(y3, prelu_reference(x3, a3), atol=1e-6, rtol=1e-6), "full-C mismatch"

    print("KERNEL_OK")
</pallas_src>

<mosaic_0001>
module attributes {stable_mosaic.version = 11 : i64} {
  func.func @_prelu_kernel(%arg0: i32, %arg1: memref<1x128xf32, #tpu.memory_space<vmem>>, %arg2: memref<1x128xf32, #tpu.memory_space<vmem>>, %arg3: memref<1x128xf32, #tpu.memory_space<vmem>>) attributes {dimension_semantics = [#tpu.dimension_semantics<parallel>], iteration_bounds = array<i64: 1>, scalar_prefetch = 0 : i64, scratch_operands = 0 : i64, tpu.core_type = #tpu.core_type<tc>, window_params = [{transform_indices = @transform_0, window_bounds = array<i64: 1, 128>}, {pipeline_mode = #tpu.pipeline_mode<synchronous>, transform_indices = @transform_1, window_bounds = array<i64: 1, 128>}, {transform_indices = @transform_2, window_bounds = array<i64: 1, 128>}]} {
    %c0 = arith.constant 0 : index
    %c0_0 = arith.constant 0 : index
    %0 = vector.load %arg1[%c0, %c0_0] : memref<1x128xf32, #tpu.memory_space<vmem>>, vector<1x128xf32>
    %cst = arith.constant 0.000000e+00 : f32
    %1 = vector.broadcast %cst : f32 to vector<1x128xf32>
    %2 = arith.cmpf oge, %0, %1 : vector<1x128xf32>
    %c0_1 = arith.constant 0 : index
    %c0_2 = arith.constant 0 : index
    %3 = vector.load %arg2[%c0_1, %c0_2] : memref<1x128xf32, #tpu.memory_space<vmem>>, vector<1x128xf32>
    %4 = arith.mulf %0, %3 : vector<1x128xf32>
    %5 = arith.select %2, %0, %4 : vector<1x128xi1>, vector<1x128xf32>
    %c0_3 = arith.constant 0 : index
    %c0_4 = arith.constant 0 : index
    %6 = vector.load %arg3[%c0_3, %c0_4] : memref<1x128xf32, #tpu.memory_space<vmem>>, vector<1x128xf32>
    tpu.vector_store %arg3[%c0_3, %c0_4], %5 {strides = array<i32>} : memref<1x128xf32, #tpu.memory_space<vmem>>, vector<1x128xf32>,
    return
  }
  func.func @transform_0(%arg0: i32) -> (i32, i32) {
    %c0_i32 = arith.constant 0 : i32
    %c0_i32_0 = arith.constant 0 : i32
    return %arg0, %c0_i32 : i32, i32
  }
  func.func @transform_1(%arg0: i32) -> (i32, i32) {
    %c0_i32 = arith.constant 0 : i32
    %c0_i32_0 = arith.constant 0 : i32
    %c0_i32_1 = arith.constant 0 : i32
    return %c0_i32, %c0_i32_0 : i32, i32
  }
  func.func @transform_2(%arg0: i32) -> (i32, i32) {
    %c0_i32 = arith.constant 0 : i32
    %c0_i32_0 = arith.constant 0 : i32
    return %arg0, %c0_i32 : i32, i32
  }
}

</mosaic_0001>

<llo_original>
// kernel: tpu_custom_call.1
$region0: #{tpu_custom_call.1}
  #allocation0 [shape = 'u32[]', space=smem, size = 0x4, offset = 0x4, fixed_abs, tag = 'smem constant byte address 0x4 - core index']
  #allocation1 [shape = 'u32[72,128]{1,0:T(1,128)}', space=vmem, size = 0x9000, scoped, tag = 'internal scratch']
  %s0 = inlined_call_operand.hbm [shape: f32[1,128], index: 0, kind: input, shape index: {}]
  %s1 = inlined_call_operand.hbm [shape: f32[1,128], index: 1, kind: input, shape index: {}]
  %s2 = inlined_call_operand.hbm [shape: f32[1,128], index: 2, kind: output, shape index: {}]
  %s3 = sld [smem:[#allocation0]]
  $region26: #{tpu_custom_call.1} parent=0
    _
  %s5 = ssub.s32 1, %s3
  %s6 = scalar_select 0, %s5, %s3
  $region1: #{tpu_custom_call.1} parent=0
    #allocation2 [shape = 'u8[512]{0}', space=vmem, size = 0x400, scoped, tag = 'input window, operand 0, single buffered']
    #allocation3 [shape = 's32[1]{0}', space=sflag, size = 0x4, scoped, tag = 'scoped memory for tpu_custom_call.1']
    #allocation4 [shape = 's32[1]{0}', space=sflag, size = 0x4, scoped, tag = 'scoped memory for tpu_custom_call.1']
    #allocation5 [shape = 'u8[512]{0}', space=vmem, size = 0x400, scoped, tag = 'input window, operand 1, single buffered']
    #allocation6 [shape = 's32[1]{0}', space=sflag, size = 0x4, scoped, tag = 'scoped memory for tpu_custom_call.1']
    #allocation7 [shape = 'u8[512]{0}', space=vmem, size = 0x400, scoped, tag = 'output window, operand 0, single buffered']
    %7 = vsyncpa [#allocation3], 0
    %8 = vsyncpa [#allocation6], 0
    %9 = vsyncpa [#allocation4], 0
    // Predicated region
    $region2: #{tpu_custom_call.1} parent=1 // pred_check
      _
    $region3: #{tpu_custom_call.1} parent=1 // pred_check_branch
      %11 = sbr.rel (0) target = $region5
    $region4: #{tpu_custom_call.1} parent=1 // pred_region
      %13 = vsyncadd [#allocation3], 0
      %s15 = sshll.u32 %s0, 4
      %s16 = int_to_ptr.hbm [resolvable:$true] %s15
      %s17 = sshll.u32 [#allocation2], 4
      %s18 = int_to_ptr.vmem [resolvable:$true] %s17
      %20 = dma.hbm_to_vmem [thread:$0]  %s16, 16, %s18, [#allocation3]
    $region5: #{tpu_custom_call.1} parent=1 // pred_fallthru
      _
    // Predicated region
    $region6: #{tpu_custom_call.1} parent=1 // pred_check
      _
    $region7: #{tpu_custom_call.1} parent=1 // pred_check_branch
      %22 = sbr.rel (0) target = $region9
    $region8: #{tpu_custom_call.1} parent=1 // pred_region
      %24 = vsyncadd [#allocation6], 0
      %s26 = sshll.u32 %s1, 4
      %s27 = int_to_ptr.hbm [resolvable:$true] %s26
      %s28 = sshll.u32 [#allocation5], 4
      %s29 = int_to_ptr.vmem [resolvable:$true] %s28
      %31 = dma.hbm_to_vmem [thread:$0]  %s27, 16, %s29, [#allocation6]
    $region9: #{tpu_custom_call.1} parent=1 // pred_fallthru
      _
    // Predicated region
    $region10: #{tpu_custom_call.1} parent=1 // pred_check
      _
    $region11: #{tpu_custom_call.1} parent=1 // pred_check_branch
      %33 = sbr.rel (0) target = $region13
    $region12: #{tpu_custom_call.1} parent=1 // pred_region
      %35 = dma.done [#allocation3], 16
    $region13: #{tpu_custom_call.1} parent=1 // pred_fallthru
      _
    // Predicated region
    $region14: #{tpu_custom_call.1} parent=1 // pred_check
      _
    $region15: #{tpu_custom_call.1} parent=1 // pred_check_branch
      %37 = sbr.rel (0) target = $region17
    $region16: #{tpu_custom_call.1} parent=1 // pred_region
      %39 = dma.done [#allocation6], 16
    $region17: #{tpu_custom_call.1} parent=1 // pred_fallthru
      _
    %v40 = vld [vmem:[#allocation2] sm:$0x1]
    %vm41 = vcmp.ge.f32.partialorder %v40, 0.0
    %v42 = vld [vmem:[#allocation5] sm:$0x1]
    %v43 = vmul.f32 %v40, %v42
    %v44 = vsel %vm41, %v40, %v43
    %45 = vst [vmem:[#allocation7] sm:$0x1] %v44
    // Predicated region
    $region18: #{tpu_custom_call.1} parent=1 // pred_check
      _
    $region19: #{tpu_custom_call.1} parent=1 // pred_check_branch
      %47 = sbr.rel (0) target = $region21
    $region20: #{tpu_custom_call.1} parent=1 // pred_region
      %49 = vsyncadd [#allocation4], 0
      %s51 = sshll.u32 [#allocation7], 4
      %s52 = int_to_ptr.vmem [resolvable:$true] %s51
      %s53 = sshll.u32 %s2, 4
      %s54 = int_to_ptr.hbm [resolvable:$true] %s53
      %56 = dma.vmem_to_hbm [thread:$0]  %s52, 16, %s54, [#allocation4]
    $region21: #{tpu_custom_call.1} parent=1 // pred_fallthru
      _
    // Predicated region
    $region22: #{tpu_custom_call.1} parent=1 // pred_check
      _
    $region23: #{tpu_custom_call.1} parent=1 // pred_check_branch
      %58 = sbr.rel (0) target = $region25
    $region24: #{tpu_custom_call.1} parent=1 // pred_region
      %60 = dma.done [#allocation4], 16
    $region25: #{tpu_custom_call.1} parent=1 // pred_fallthru
      _
    %61 = vsyncpa [#allocation3], 1
    %62 = vsyncpa [#allocation6], 1
    %63 = vsyncpa [#allocation4], 1

</llo_original>
